<compile_context>
chip_gen: v7x
topology: tpu7x:2x2x1
jax: 0.10.0
libtpu: 0.0.40
codegen_flags: <defaults>
</compile_context>

<pallas_src>
import functools

import jax
import jax.numpy as jnp
from jax import lax
from jax.experimental import pallas as pl
from jax.experimental.pallas import tpu as pltpu

LANES = 128


def _cdiv(a, b):
    return (a + b - 1) // b


def _round_up(a, b):
    return _cdiv(a, b) * b


# ---------------------------------------------------------------------------
# In-kernel helpers (pure VPU; batch dense on (sublane, lane)).
# ---------------------------------------------------------------------------

def _read_params(w1_ref, b1_ref, w2_ref, b2_ref):
    """Read the 17 weight/bias scalars from SMEM once per kernel."""
    w1v = tuple(w1_ref[i] for i in range(6))   # w1v[j*2 + i] = fc1.weight[j, i]
    b1v = tuple(b1_ref[i] for i in range(3))
    w2v = tuple(w2_ref[i] for i in range(6))   # w2v[k*3 + j] = fc2.weight[k, j]
    b2v = tuple(b2_ref[i] for i in range(2))
    return w1v, b1v, w2v, b2v


def _mlp_chunk(x0, x1, params):
    """fc1 -> ReLU -> fc2 for one (cr, 128) chunk. Returns (y0, y1) logits."""
    w1v, b1v, w2v, b2v = params
    h = []
    for j in range(3):
        hj = x0 * w1v[2 * j + 0] + x1 * w1v[2 * j + 1] + b1v[j]
        h.append(jnp.maximum(hj, 0.0))
    y0 = h[0] * w2v[0] + h[1] * w2v[1] + h[2] * w2v[2] + b2v[0]
    y1 = h[0] * w2v[3] + h[1] * w2v[4] + h[2] * w2v[5] + b2v[1]
    return y0, y1


def _online_update(y0, y1, m_sc, l_sc):
    """Streaming per-class max / sum-exp update. m_sc, l_sc: (2,1) VMEM."""
    for k, yk in enumerate((y0, y1)):
        m_old = m_sc[k:k + 1, :]
        l_old = l_sc[k:k + 1, :]
        mk = jnp.max(jnp.max(yk, axis=1, keepdims=True), axis=0, keepdims=True)
        m_new = jnp.maximum(m_old, mk)
        sk = jnp.sum(jnp.sum(jnp.exp(yk - m_new), axis=1, keepdims=True),
                     axis=0, keepdims=True)
        l_sc[k:k + 1, :] = l_old * jnp.exp(m_old - m_new) + sk
        m_sc[k:k + 1, :] = m_new


def _valid_mask(row0, cr, n_valid):
    """(cr, 128) bool: sample index (row0+r)*128 + c  <  n_valid."""
    row = lax.broadcasted_iota(jnp.int32, (cr, LANES), 0)
    col = lax.broadcasted_iota(jnp.int32, (cr, LANES), 1)
    return (row0 + row) * LANES + col < n_valid


# ---------------------------------------------------------------------------
# Path A: single launch, whole (padded) batch resident in VMEM.
# ---------------------------------------------------------------------------

def _single_shot_kernel(x_ref, w1_ref, b1_ref, w2_ref, b2_ref, out_ref,
                        m_sc, l_sc, *, n_valid, chunk_rows):
    cr = chunk_rows
    span = cr * LANES
    n_valid_chunks = _cdiv(n_valid, span)    # static
    n_full = n_valid // span                 # static (fully-valid chunks)

    params = _read_params(w1_ref, b1_ref, w2_ref, b2_ref)

    m_sc[...] = jnp.full_like(m_sc, -jnp.inf)
    l_sc[...] = jnp.zeros_like(l_sc)

    def process(row0, valid=None):
        x0 = x_ref[0, pl.ds(row0, cr), :]
        x1 = x_ref[1, pl.ds(row0, cr), :]
        y0, y1 = _mlp_chunk(x0, x1, params)
        out_ref[0, pl.ds(row0, cr), :] = y0        # raw logits, fixed later
        out_ref[1, pl.ds(row0, cr), :] = y1
        if valid is not None:
            y0 = jnp.where(valid, y0, -jnp.inf)
            y1 = jnp.where(valid, y1, -jnp.inf)
        _online_update(y0, y1, m_sc, l_sc)

    # Phase 1a: interior chunks -- unmasked fast path.
    def stats_body(t, carry):
        process(pl.multiple_of(t * cr, cr))
        return carry
    lax.fori_loop(0, n_full, stats_body, 0)

    # Phase 1b: ragged boundary chunk (static decision; >= 1 valid lane).
    if n_full < n_valid_chunks:
        row0 = n_full * cr
        process(row0, _valid_mask(row0, cr, n_valid))

    # Per-class log-sum-exp.
    lse0 = m_sc[0:1, :] + jnp.log(l_sc[0:1, :])
    lse1 = m_sc[1:2, :] + jnp.log(l_sc[1:2, :])

    # Phase 2: normalize in place (VMEM only, no recompute, no extra HBM).
    def norm_body(t, carry):
        row0 = pl.multiple_of(t * cr, cr)
        out_ref[0, pl.ds(row0, cr), :] = out_ref[0, pl.ds(row0, cr), :] - lse0
        out_ref[1, pl.ds(row0, cr), :] = out_ref[1, pl.ds(row0, cr), :] - lse1
        return carry
    lax.fori_loop(0, n_valid_chunks, norm_body, 0)


# ---------------------------------------------------------------------------
# Path B: two-pass streaming grid for batches too large to keep resident.
# ---------------------------------------------------------------------------

def _stats_kernel(x_ref, w1_ref, b1_ref, w2_ref, b2_ref, lse_ref,
                  m_sc, l_sc, *, n_valid, n_tiles, tile_rows, chunk_rows):
    i = pl.program_id(0)
    cr = chunk_rows
    n_chunks = tile_rows // cr
    tile_span = tile_rows * LANES

    params = _read_params(w1_ref, b1_ref, w2_ref, b2_ref)

    @pl.when(i == 0)
    def _():
        m_sc[...] = jnp.full_like(m_sc, -jnp.inf)
        l_sc[...] = jnp.zeros_like(l_sc)

    def accum(row0, valid=None):
        x0 = x_ref[0, pl.ds(row0, cr), :]
        x1 = x_ref[1, pl.ds(row0, cr), :]
        y0, y1 = _mlp_chunk(x0, x1, params)
        if valid is not None:
            y0 = jnp.where(valid, y0, -jnp.inf)
            y1 = jnp.where(valid, y1, -jnp.inf)
        _online_update(y0, y1, m_sc, l_sc)

    if n_tiles > 1:
        # Interior tiles: fully valid -> unmasked fast path.
        @pl.when(i != n_tiles - 1)
        def _():
            def body(t, carry):
                accum(pl.multiple_of(t * cr, cr))
                return carry
            lax.fori_loop(0, n_chunks, body, 0)

    # Last tile: the within-tile boundary is static (>= 1 valid sample).
    @pl.when(i == n_tiles - 1)
    def _():
        local_valid = n_valid - (n_tiles - 1) * tile_span
        span = cr * LANES
        lt_full = local_valid // span
        lt_cnt = _cdiv(local_valid, span)

        def body(t, carry):
            accum(pl.multiple_of(t * cr, cr))
            return carry
        lax.fori_loop(0, lt_full, body, 0)

        if lt_full < lt_cnt:                       # ragged (masked) chunk
            row0 = lt_full * cr
            accum(row0, _valid_mask(row0, cr, local_valid))

        lse_ref[...] = m_sc[...] + jnp.log(l_sc[...])


def _normalize_kernel(x_ref, lse_ref, w1_ref, b1_ref, w2_ref, b2_ref, out_ref,
                      *, chunk_rows):
    cr = chunk_rows
    n_chunks = x_ref.shape[1] // cr

    params = _read_params(w1_ref, b1_ref, w2_ref, b2_ref)
    lse0 = lse_ref[0]                              # SMEM scalars
    lse1 = lse_ref[1]

    def body(t, carry):
        row0 = pl.multiple_of(t * cr, cr)
        x0 = x_ref[0, pl.ds(row0, cr), :]
        x1 = x_ref[1, pl.ds(row0, cr), :]
        y0, y1 = _mlp_chunk(x0, x1, params)
        out_ref[0, pl.ds(row0, cr), :] = y0 - lse0
        out_ref[1, pl.ds(row0, cr), :] = y1 - lse1
        return carry
    lax.fori_loop(0, n_chunks, body, 0)


# ---------------------------------------------------------------------------
# Wrapper
# ---------------------------------------------------------------------------

def _vmem_capacity_bytes():
    try:
        return int(pltpu.get_tpu_info().vmem_capacity_bytes)
    except Exception:
        return 64 << 20          # conservative: v7x per-TensorCore VMEM


def net_forward(x, w1, b1, w2, b2, *, chunk_rows=8, tile_rows=512, path="auto"):
    """Forward pass of `Net`.  x: (N, 2) -> (N, 2) log-probs (softmax over dim 0)."""
    N = x.shape[0]
    assert x.shape[1] == 2 and N >= 1
    chunk_rows = max(8, _round_up(chunk_rows, 8))

    smem = pl.BlockSpec(memory_space=pltpu.MemorySpace.SMEM)
    w1f = jnp.asarray(w1, jnp.float32).reshape(-1)   # (6,)
    b1f = jnp.asarray(b1, jnp.float32).reshape(-1)   # (3,)
    w2f = jnp.asarray(w2, jnp.float32).reshape(-1)   # (6,)
    b2f = jnp.asarray(b2, jnp.float32).reshape(-1)   # (2,)

    vmem_cap = _vmem_capacity_bytes()

    # Single-shot footprint: (2,R,128) f32 for x and out, double-buffered.
    r_single = _round_up(_cdiv(N, LANES), chunk_rows)
    blk_bytes = 2 * r_single * LANES * 4
    single_bytes = 2 * (blk_bytes + blk_bytes)
    if path == "single":
        use_single = True
    elif path == "grid":
        use_single = False
    else:
        use_single = single_bytes <= vmem_cap - (16 << 20)

    if use_single:
        R = r_single
    else:
        tile_rows = max(chunk_rows, _round_up(tile_rows, chunk_rows))
        R = _round_up(_cdiv(N, LANES), tile_rows)
    npad = R * LANES

    # (N, 2) -> (2, R, 128): batch dense on (sublane, lane).  One XLA relayout
    # copy each way; see TODO at top for the fully copy-free variant.
    xp = jnp.pad(jnp.asarray(x, jnp.float32), ((0, npad - N), (0, 0)))
    xt = jnp.transpose(xp.reshape(R, LANES, 2), (2, 0, 1))

    if use_single:
        vmem_limit = int(min(vmem_cap - (4 << 20),
                             max(64 << 20, single_bytes + (8 << 20))))
        out = pl.pallas_call(
            functools.partial(_single_shot_kernel,
                              n_valid=N, chunk_rows=chunk_rows),
            out_shape=jax.ShapeDtypeStruct((2, R, LANES), jnp.float32),
            grid=(1,),
            in_specs=[pl.BlockSpec((2, R, LANES), lambda i: (0, 0, 0)),
                      smem, smem, smem, smem],
            out_specs=pl.BlockSpec((2, R, LANES), lambda i: (0, 0, 0)),
            scratch_shapes=[pltpu.VMEM((2, 1), jnp.float32),
                            pltpu.VMEM((2, 1), jnp.float32)],
            compiler_params=pltpu.CompilerParams(
                dimension_semantics=("arbitrary",),
                vmem_limit_bytes=vmem_limit),
        )(xt, w1f, b1f, w2f, b2f)
    else:
        n_tiles = R // tile_rows
        x_spec = pl.BlockSpec((2, tile_rows, LANES), lambda i: (0, i, 0))

        # Pass 1: per-class log-sum-exp over the whole batch (sequential).
        lse = pl.pallas_call(
            functools.partial(_stats_kernel, n_valid=N, n_tiles=n_tiles,
                              tile_rows=tile_rows, chunk_rows=chunk_rows),
            out_shape=jax.ShapeDtypeStruct((2, 1), jnp.float32),
            grid=(n_tiles,),
            in_specs=[x_spec, smem, smem, smem, smem],
            out_specs=pl.BlockSpec((2, 1), lambda i: (0, 0)),
            scratch_shapes=[pltpu.VMEM((2, 1), jnp.float32),
                            pltpu.VMEM((2, 1), jnp.float32)],
            compiler_params=pltpu.CompilerParams(
                dimension_semantics=("arbitrary",),
                vmem_limit_bytes=32 * 1024 * 1024),
        )(xt, w1f, b1f, w2f, b2f)

        # Pass 2: recompute logits per tile, subtract the SMEM-resident LSE.
        out = pl.pallas_call(
            functools.partial(_normalize_kernel, chunk_rows=chunk_rows),
            out_shape=jax.ShapeDtypeStruct((2, R, LANES), jnp.float32),
            grid=(n_tiles,),
            in_specs=[x_spec, smem, smem, smem, smem, smem],
            out_specs=pl.BlockSpec((2, tile_rows, LANES), lambda i: (0, i, 0)),
            compiler_params=pltpu.CompilerParams(
                dimension_semantics=("parallel",),
                vmem_limit_bytes=32 * 1024 * 1024),
        )(xt, lse.reshape(2), w1f, b1f, w2f, b2f)

    # Back to the caller's (N, 2) layout.
    return jnp.transpose(out, (1, 2, 0)).reshape(npad, 2)[:N]


def reference(x, w1, b1, w2, b2):
    h = jnp.maximum(x @ w1.T + b1, 0.0)
    y = h @ w2.T + b2
    return jax.nn.log_softmax(y, axis=0)


if __name__ == "__main__":
    key = jax.random.PRNGKey(0)
    k1, k2, k3, k4, kx1, kx2, kx3 = jax.random.split(key, 7)

    # Deterministic parameters (shapes from the module's __init__).
    w1 = jax.random.normal(k1, (3, 2), dtype=jnp.float32) * 0.5   # fc1.weight
    b1 = jax.random.normal(k2, (3,), dtype=jnp.float32) * 0.1     # fc1.bias
    w2 = jax.random.normal(k3, (2, 3), dtype=jnp.float32) * 0.5   # fc2.weight
    b2 = jax.random.normal(k4, (2,), dtype=jnp.float32) * 0.1     # fc2.bias

    # 1) tiny batch -> single-shot VMEM-resident path (ragged masked chunk).
    x_small = jax.random.normal(kx1, (8, 2), dtype=jnp.float32)
    out_small = net_forward(x_small, w1, b1, w2, b2)
    jax.block_until_ready(out_small)
    assert out_small.shape == (8, 2)
    assert jnp.allclose(out_small, reference(x_small, w1, b1, w2, b2),
                        atol=1e-4, rtol=1e-5), "single-shot small-batch mismatch"

    # 2) medium batch -> single-shot path with several full chunks + ragged tail.
    x_med = jax.random.normal(kx2, (5000, 2), dtype=jnp.float32)
    out_med = net_forward(x_med, w1, b1, w2, b2)
    jax.block_until_ready(out_med)
    assert out_med.shape == (5000, 2)
    assert jnp.allclose(out_med, reference(x_med, w1, b1, w2, b2),
                        atol=1e-4, rtol=1e-5), "single-shot medium-batch mismatch"

    # 3) forced grid fallback (small tiles so multiple grid steps + last-tile
    #    masking + online two-pass softmax are all exercised).
    x_big = jax.random.normal(kx3, (2500, 2), dtype=jnp.float32)
    out_big = net_forward(x_big, w1, b1, w2, b2, tile_rows=16, path="grid")
    jax.block_until_ready(out_big)
    assert out_big.shape == (2500, 2)
    assert jnp.allclose(out_big, reference(x_big, w1, b1, w2, b2),
                        atol=1e-4, rtol=1e-5), "grid-path mismatch"

    print("KERNEL_OK")
</pallas_src>

<mosaic_0001>
module attributes {stable_mosaic.version = 11 : i64} {
  func.func @_single_shot_kernel(%arg0: i32, %arg1: memref<2x8x128xf32, #tpu.memory_space<vmem>>, %arg2: memref<6xf32, #tpu.memory_space<smem>>, %arg3: memref<3xf32, #tpu.memory_space<smem>>, %arg4: memref<6xf32, #tpu.memory_space<smem>>, %arg5: memref<2xf32, #tpu.memory_space<smem>>, %arg6: memref<2x8x128xf32, #tpu.memory_space<vmem>>, %arg7: memref<2x1xf32, #tpu.memory_space<vmem>>, %arg8: memref<2x1xf32, #tpu.memory_space<vmem>>) attributes {dimension_semantics = [#tpu.dimension_semantics<arbitrary>], iteration_bounds = array<i64: 1>, scalar_prefetch = 0 : i64, scratch_operands = 2 : i64, tpu.core_type = #tpu.core_type<tc>, window_params = [{pipeline_mode = #tpu.pipeline_mode<synchronous>, transform_indices = @transform_0, window_bounds = array<i64: 2, 8, 128>}, {transform_indices = @transform_1, window_bounds = array<i64: 6>}, {transform_indices = @transform_2, window_bounds = array<i64: 3>}, {transform_indices = @transform_3, window_bounds = array<i64: 6>}, {transform_indices = @transform_4, window_bounds = array<i64: 2>}, {pipeline_mode = #tpu.pipeline_mode<synchronous>, transform_indices = @transform_5, window_bounds = array<i64: 2, 8, 128>}]} {
    %c0 = arith.constant 0 : index
    %0 = memref.load %arg2[%c0] : memref<6xf32, #tpu.memory_space<smem>>
    %c1 = arith.constant 1 : index
    %1 = memref.load %arg2[%c1] : memref<6xf32, #tpu.memory_space<smem>>
    %c2 = arith.constant 2 : index
    %2 = memref.load %arg2[%c2] : memref<6xf32, #tpu.memory_space<smem>>
    %c3 = arith.constant 3 : index
    %3 = memref.load %arg2[%c3] : memref<6xf32, #tpu.memory_space<smem>>
    %c4 = arith.constant 4 : index
    %4 = memref.load %arg2[%c4] : memref<6xf32, #tpu.memory_space<smem>>
    %c5 = arith.constant 5 : index
    %5 = memref.load %arg2[%c5] : memref<6xf32, #tpu.memory_space<smem>>
    %c0_0 = arith.constant 0 : index
    %6 = memref.load %arg3[%c0_0] : memref<3xf32, #tpu.memory_space<smem>>
    %c1_1 = arith.constant 1 : index
    %7 = memref.load %arg3[%c1_1] : memref<3xf32, #tpu.memory_space<smem>>
    %c2_2 = arith.constant 2 : index
    %8 = memref.load %arg3[%c2_2] : memref<3xf32, #tpu.memory_space<smem>>
    %c0_3 = arith.constant 0 : index
    %9 = memref.load %arg4[%c0_3] : memref<6xf32, #tpu.memory_space<smem>>
    %c1_4 = arith.constant 1 : index
    %10 = memref.load %arg4[%c1_4] : memref<6xf32, #tpu.memory_space<smem>>
    %c2_5 = arith.constant 2 : index
    %11 = memref.load %arg4[%c2_5] : memref<6xf32, #tpu.memory_space<smem>>
    %c3_6 = arith.constant 3 : index
    %12 = memref.load %arg4[%c3_6] : memref<6xf32, #tpu.memory_space<smem>>
    %c4_7 = arith.constant 4 : index
    %13 = memref.load %arg4[%c4_7] : memref<6xf32, #tpu.memory_space<smem>>
    %c5_8 = arith.constant 5 : index
    %14 = memref.load %arg4[%c5_8] : memref<6xf32, #tpu.memory_space<smem>>
    %c0_9 = arith.constant 0 : index
    %15 = memref.load %arg5[%c0_9] : memref<2xf32, #tpu.memory_space<smem>>
    %c1_10 = arith.constant 1 : index
    %16 = memref.load %arg5[%c1_10] : memref<2xf32, #tpu.memory_space<smem>>
    %cst = arith.constant 0xFF800000 : f32
    %17 = vector.broadcast %cst : f32 to vector<2x1xf32>
    %c0_11 = arith.constant 0 : index
    %c0_12 = arith.constant 0 : index
    %18 = vector.load %arg7[%c0_11, %c0_12] : memref<2x1xf32, #tpu.memory_space<vmem>>, vector<2x1xf32>
    tpu.vector_store %arg7[%c0_11, %c0_12], %17 {strides = array<i32>} : memref<2x1xf32, #tpu.memory_space<vmem>>, vector<2x1xf32>,
    %cst_13 = arith.constant 0.000000e+00 : f32
    %19 = vector.broadcast %cst_13 : f32 to vector<2x1xf32>
    %c0_14 = arith.constant 0 : index
    %c0_15 = arith.constant 0 : index
    %20 = vector.load %arg8[%c0_14, %c0_15] : memref<2x1xf32, #tpu.memory_space<vmem>>, vector<2x1xf32>
    tpu.vector_store %arg8[%c0_14, %c0_15], %19 {strides = array<i32>} : memref<2x1xf32, #tpu.memory_space<vmem>>, vector<2x1xf32>,
    %c0_i32 = arith.constant 0 : i32
    %c0_i32_16 = arith.constant 0 : i32
    %21 = arith.addi %c0_i32, %c0_i32_16 : i32
    %c1_i32 = arith.constant 1 : i32
    scf.for %arg9 = %c0_i32 to %21 step %c1_i32  : i32 {
      %c8_i32_79 = arith.constant 8 : i32
      %160 = arith.muli %arg9, %c8_i32_79 : i32
      %161 = tpu.assume_multiple %160, 8 : i32
      %c0_80 = arith.constant 0 : index
      %162 = arith.index_cast %161 : i32 to index
      %c0_81 = arith.constant 0 : index
      %163 = vector.load %arg1[%c0_80, %162, %c0_81] : memref<2x8x128xf32, #tpu.memory_space<vmem>>, vector<1x8x128xf32>
      %164 = vector.shape_cast %163 : vector<1x8x128xf32> to vector<8x128xf32>
      %c1_82 = arith.constant 1 : index
      %165 = arith.index_cast %161 : i32 to index
      %c0_83 = arith.constant 0 : index
      %166 = vector.load %arg1[%c1_82, %165, %c0_83] : memref<2x8x128xf32, #tpu.memory_space<vmem>>, vector<1x8x128xf32>
      %167 = vector.shape_cast %166 : vector<1x8x128xf32> to vector<8x128xf32>
      %168 = vector.broadcast %0 : f32 to vector<8x128xf32>
      %169 = arith.mulf %164, %168 : vector<8x128xf32>
      %170 = vector.broadcast %1 : f32 to vector<8x128xf32>
      %171 = arith.mulf %167, %170 : vector<8x128xf32>
      %172 = arith.addf %169, %171 : vector<8x128xf32>
      %173 = vector.broadcast %6 : f32 to vector<8x128xf32>
      %174 = arith.addf %172, %173 : vector<8x128xf32>
      %cst_84 = arith.constant 0.000000e+00 : f32
      %175 = vector.broadcast %cst_84 : f32 to vector<8x128xf32>
      %176 = arith.maximumf %174, %175 : vector<8x128xf32>
      %177 = vector.broadcast %2 : f32 to vector<8x128xf32>
      %178 = arith.mulf %164, %177 : vector<8x128xf32>
      %179 = vector.broadcast %3 : f32 to vector<8x128xf32>
      %180 = arith.mulf %167, %179 : vector<8x128xf32>
      %181 = arith.addf %178, %180 : vector<8x128xf32>
      %182 = vector.broadcast %7 : f32 to vector<8x128xf32>
      %183 = arith.addf %181, %182 : vector<8x128xf32>
      %cst_85 = arith.constant 0.000000e+00 : f32
      %184 = vector.broadcast %cst_85 : f32 to vector<8x128xf32>
      %185 = arith.maximumf %183, %184 : vector<8x128xf32>
      %186 = vector.broadcast %4 : f32 to vector<8x128xf32>
      %187 = arith.mulf %164, %186 : vector<8x128xf32>
      %188 = vector.broadcast %5 : f32 to vector<8x128xf32>
      %189 = arith.mulf %167, %188 : vector<8x128xf32>
      %190 = arith.addf %187, %189 : vector<8x128xf32>
      %191 = vector.broadcast %8 : f32 to vector<8x128xf32>
      %192 = arith.addf %190, %191 : vector<8x128xf32>
      %cst_86 = arith.constant 0.000000e+00 : f32
      %193 = vector.broadcast %cst_86 : f32 to vector<8x128xf32>
      %194 = arith.maximumf %192, %193 : vector<8x128xf32>
      %195 = vector.broadcast %9 : f32 to vector<8x128xf32>
      %196 = arith.mulf %176, %195 : vector<8x128xf32>
      %197 = vector.broadcast %10 : f32 to vector<8x128xf32>
      %198 = arith.mulf %185, %197 : vector<8x128xf32>
      %199 = arith.addf %196, %198 : vector<8x128xf32>
      %200 = vector.broadcast %11 : f32 to vector<8x128xf32>
      %201 = arith.mulf %194, %200 : vector<8x128xf32>
      %202 = arith.addf %199, %201 : vector<8x128xf32>
      %203 = vector.broadcast %15 : f32 to vector<8x128xf32>
      %204 = arith.addf %202, %203 : vector<8x128xf32>
      %205 = vector.broadcast %12 : f32 to vector<8x128xf32>
      %206 = arith.mulf %176, %205 : vector<8x128xf32>
      %207 = vector.broadcast %13 : f32 to vector<8x128xf32>
      %208 = arith.mulf %185, %207 : vector<8x128xf32>
      %209 = arith.addf %206, %208 : vector<8x128xf32>
      %210 = vector.broadcast %14 : f32 to vector<8x128xf32>
      %211 = arith.mulf %194, %210 : vector<8x128xf32>
      %212 = arith.addf %209, %211 : vector<8x128xf32>
      %213 = vector.broadcast %16 : f32 to vector<8x128xf32>
      %214 = arith.addf %212, %213 : vector<8x128xf32>
      %c0_87 = arith.constant 0 : index
      %215 = arith.index_cast %161 : i32 to index
      %c0_88 = arith.constant 0 : index
      %216 = vector.load %arg6[%c0_87, %215, %c0_88] : memref<2x8x128xf32, #tpu.memory_space<vmem>>, vector<1x8x128xf32>
      %217 = vector.shape_cast %216 : vector<1x8x128xf32> to vector<8x128xf32>
      %218 = vector.shape_cast %204 : vector<8x128xf32> to vector<1x8x128xf32>
      tpu.vector_store %arg6[%c0_87, %215, %c0_88], %218 {strides = array<i32>} : memref<2x8x128xf32, #tpu.memory_space<vmem>>, vector<1x8x128xf32>,
      %c1_89 = arith.constant 1 : index
      %219 = arith.index_cast %161 : i32 to index
      %c0_90 = arith.constant 0 : index
      %220 = vector.load %arg6[%c1_89, %219, %c0_90] : memref<2x8x128xf32, #tpu.memory_space<vmem>>, vector<1x8x128xf32>
      %221 = vector.shape_cast %220 : vector<1x8x128xf32> to vector<8x128xf32>
      %222 = vector.shape_cast %214 : vector<8x128xf32> to vector<1x8x128xf32>
      tpu.vector_store %arg6[%c1_89, %219, %c0_90], %222 {strides = array<i32>} : memref<2x8x128xf32, #tpu.memory_space<vmem>>, vector<1x8x128xf32>,
      %c0_91 = arith.constant 0 : index
      %c0_92 = arith.constant 0 : index
      %223 = vector.load %arg7[%c0_91, %c0_92] : memref<2x1xf32, #tpu.memory_space<vmem>>, vector<1x1xf32>
      %c0_93 = arith.constant 0 : index
      %c0_94 = arith.constant 0 : index
      %224 = vector.load %arg8[%c0_93, %c0_94] : memref<2x1xf32, #tpu.memory_space<vmem>>, vector<1x1xf32>
      %cst_95 = arith.constant dense<0xFF800000> : vector<8xf32>
      %225 = vector.multi_reduction <maximumf>, %204, %cst_95 [1] : vector<8x128xf32> to vector<8xf32>
      %226 = vector.shape_cast %225 : vector<8xf32> to vector<8x1xf32>
      %cst_96 = arith.constant dense<0xFF800000> : vector<1xf32>
      %227 = vector.multi_reduction <maximumf>, %226, %cst_96 [0] : vector<8x1xf32> to vector<1xf32>
      %228 = vector.shape_cast %227 : vector<1xf32> to vector<1x1xf32>
      %229 = arith.maximumf %223, %228 : vector<1x1xf32>
      %230 = vector.broadcast %229 : vector<1x1xf32> to vector<8x128xf32>
      %231 = arith.subf %204, %230 : vector<8x128xf32>
      %232 = math.exp %231 : vector<8x128xf32>
      %cst_97 = arith.constant dense<0.000000e+00> : vector<8xf32>
      %233 = vector.multi_reduction <add>, %232, %cst_97 [1] : vector<8x128xf32> to vector<8xf32>
      %234 = vector.shape_cast %233 : vector<8xf32> to vector<8x1xf32>
      %cst_98 = arith.constant dense<0.000000e+00> : vector<1xf32>
      %235 = vector.multi_reduction <add>, %234, %cst_98 [0] : vector<8x1xf32> to vector<1xf32>
      %236 = vector.shape_cast %235 : vector<1xf32> to vector<1x1xf32>
      %237 = arith.subf %223, %229 : vector<1x1xf32>
      %238 = math.exp %237 : vector<1x1xf32>
      %239 = arith.mulf %224, %238 : vector<1x1xf32>
      %240 = arith.addf %239, %236 : vector<1x1xf32>
      %c0_99 = arith.constant 0 : index
      %c0_100 = arith.constant 0 : index
      %241 = vector.load %arg8[%c0_99, %c0_100] : memref<2x1xf32, #tpu.memory_space<vmem>>, vector<1x1xf32>
      tpu.vector_store %arg8[%c0_99, %c0_100], %240 {strides = array<i32>} : memref<2x1xf32, #tpu.memory_space<vmem>>, vector<1x1xf32>,
      %c0_101 = arith.constant 0 : index
      %c0_102 = arith.constant 0 : index
      %242 = vector.load %arg7[%c0_101, %c0_102] : memref<2x1xf32, #tpu.memory_space<vmem>>, vector<1x1xf32>
      tpu.vector_store %arg7[%c0_101, %c0_102], %229 {strides = array<i32>} : memref<2x1xf32, #tpu.memory_space<vmem>>, vector<1x1xf32>,
      %c1_103 = arith.constant 1 : index
      %c0_104 = arith.constant 0 : index
      %243 = vector.load %arg7[%c1_103, %c0_104] : memref<2x1xf32, #tpu.memory_space<vmem>>, vector<1x1xf32>
      %c1_105 = arith.constant 1 : index
      %c0_106 = arith.constant 0 : index
      %244 = vector.load %arg8[%c1_105, %c0_106] : memref<2x1xf32, #tpu.memory_space<vmem>>, vector<1x1xf32>
      %cst_107 = arith.constant dense<0xFF800000> : vector<8xf32>
      %245 = vector.multi_reduction <maximumf>, %214, %cst_107 [1] : vector<8x128xf32> to vector<8xf32>
      %246 = vector.shape_cast %245 : vector<8xf32> to vector<8x1xf32>
      %cst_108 = arith.constant dense<0xFF800000> : vector<1xf32>
      %247 = vector.multi_reduction <maximumf>, %246, %cst_108 [0] : vector<8x1xf32> to vector<1xf32>
      %248 = vector.shape_cast %247 : vector<1xf32> to vector<1x1xf32>
      %249 = arith.maximumf %243, %248 : vector<1x1xf32>
      %250 = vector.broadcast %249 : vector<1x1xf32> to vector<8x128xf32>
      %251 = arith.subf %214, %250 : vector<8x128xf32>
      %252 = math.exp %251 : vector<8x128xf32>
      %cst_109 = arith.constant dense<0.000000e+00> : vector<8xf32>
      %253 = vector.multi_reduction <add>, %252, %cst_109 [1] : vector<8x128xf32> to vector<8xf32>
      %254 = vector.shape_cast %253 : vector<8xf32> to vector<8x1xf32>
      %cst_110 = arith.constant dense<0.000000e+00> : vector<1xf32>
      %255 = vector.multi_reduction <add>, %254, %cst_110 [0] : vector<8x1xf32> to vector<1xf32>
      %256 = vector.shape_cast %255 : vector<1xf32> to vector<1x1xf32>
      %257 = arith.subf %243, %249 : vector<1x1xf32>
      %258 = math.exp %257 : vector<1x1xf32>
      %259 = arith.mulf %244, %258 : vector<1x1xf32>
      %260 = arith.addf %259, %256 : vector<1x1xf32>
      %c1_111 = arith.constant 1 : index
      %c0_112 = arith.constant 0 : index
      %261 = vector.load %arg8[%c1_111, %c0_112] : memref<2x1xf32, #tpu.memory_space<vmem>>, vector<1x1xf32>
      tpu.vector_store %arg8[%c1_111, %c0_112], %260 {strides = array<i32>} : memref<2x1xf32, #tpu.memory_space<vmem>>, vector<1x1xf32>,
      %c1_113 = arith.constant 1 : index
      %c0_114 = arith.constant 0 : index
      %262 = vector.load %arg7[%c1_113, %c0_114] : memref<2x1xf32, #tpu.memory_space<vmem>>, vector<1x1xf32>
      tpu.vector_store %arg7[%c1_113, %c0_114], %249 {strides = array<i32>} : memref<2x1xf32, #tpu.memory_space<vmem>>, vector<1x1xf32>,
    }
    %c0_i32_17 = arith.constant 0 : i32
    %22 = tpu.iota {dimensions = array<i32: 0>} : vector<8x128xi32>
    %23 = tpu.iota {dimensions = array<i32: 1>} : vector<8x128xi32>
    %c0_i32_18 = arith.constant 0 : i32
    %24 = vector.broadcast %c0_i32_18 : i32 to vector<8x128xi32>
    %25 = arith.addi %24, %22 : vector<8x128xi32>
    %c128_i32 = arith.constant 128 : i32
    %26 = vector.broadcast %c128_i32 : i32 to vector<8x128xi32>
    %27 = arith.muli %25, %26 : vector<8x128xi32>
    %28 = arith.addi %27, %23 : vector<8x128xi32>
    %c8_i32 = arith.constant 8 : i32
    %29 = vector.broadcast %c8_i32 : i32 to vector<8x128xi32>
    %30 = arith.cmpi slt, %28, %29 : vector<8x128xi32>
    %c0_19 = arith.constant 0 : index
    %c0_20 = arith.constant 0 : index
    %c0_21 = arith.constant 0 : index
    %31 = vector.load %arg1[%c0_19, %c0_20, %c0_21] : memref<2x8x128xf32, #tpu.memory_space<vmem>>, vector<1x8x128xf32>
    %32 = vector.shape_cast %31 : vector<1x8x128xf32> to vector<8x128xf32>
    %c1_22 = arith.constant 1 : index
    %c0_23 = arith.constant 0 : index
    %c0_24 = arith.constant 0 : index
    %33 = vector.load %arg1[%c1_22, %c0_23, %c0_24] : memref<2x8x128xf32, #tpu.memory_space<vmem>>, vector<1x8x128xf32>
    %34 = vector.shape_cast %33 : vector<1x8x128xf32> to vector<8x128xf32>
    %35 = vector.broadcast %0 : f32 to vector<8x128xf32>
    %36 = arith.mulf %32, %35 : vector<8x128xf32>
    %37 = vector.broadcast %1 : f32 to vector<8x128xf32>
    %38 = arith.mulf %34, %37 : vector<8x128xf32>
    %39 = arith.addf %36, %38 : vector<8x128xf32>
    %40 = vector.broadcast %6 : f32 to vector<8x128xf32>
    %41 = arith.addf %39, %40 : vector<8x128xf32>
    %cst_25 = arith.constant 0.000000e+00 : f32
    %42 = vector.broadcast %cst_25 : f32 to vector<8x128xf32>
    %43 = arith.maximumf %41, %42 : vector<8x128xf32>
    %44 = vector.broadcast %2 : f32 to vector<8x128xf32>
    %45 = arith.mulf %32, %44 : vector<8x128xf32>
    %46 = vector.broadcast %3 : f32 to vector<8x128xf32>
    %47 = arith.mulf %34, %46 : vector<8x128xf32>
    %48 = arith.addf %45, %47 : vector<8x128xf32>
    %49 = vector.broadcast %7 : f32 to vector<8x128xf32>
    %50 = arith.addf %48, %49 : vector<8x128xf32>
    %cst_26 = arith.constant 0.000000e+00 : f32
    %51 = vector.broadcast %cst_26 : f32 to vector<8x128xf32>
    %52 = arith.maximumf %50, %51 : vector<8x128xf32>
    %53 = vector.broadcast %4 : f32 to vector<8x128xf32>
    %54 = arith.mulf %32, %53 : vector<8x128xf32>
    %55 = vector.broadcast %5 : f32 to vector<8x128xf32>
    %56 = arith.mulf %34, %55 : vector<8x128xf32>
    %57 = arith.addf %54, %56 : vector<8x128xf32>
    %58 = vector.broadcast %8 : f32 to vector<8x128xf32>
    %59 = arith.addf %57, %58 : vector<8x128xf32>
    %cst_27 = arith.constant 0.000000e+00 : f32
    %60 = vector.broadcast %cst_27 : f32 to vector<8x128xf32>
    %61 = arith.maximumf %59, %60 : vector<8x128xf32>
    %62 = vector.broadcast %9 : f32 to vector<8x128xf32>
    %63 = arith.mulf %43, %62 : vector<8x128xf32>
    %64 = vector.broadcast %10 : f32 to vector<8x128xf32>
    %65 = arith.mulf %52, %64 : vector<8x128xf32>
    %66 = arith.addf %63, %65 : vector<8x128xf32>
    %67 = vector.broadcast %11 : f32 to vector<8x128xf32>
    %68 = arith.mulf %61, %67 : vector<8x128xf32>
    %69 = arith.addf %66, %68 : vector<8x128xf32>
    %70 = vector.broadcast %15 : f32 to vector<8x128xf32>
    %71 = arith.addf %69, %70 : vector<8x128xf32>
    %72 = vector.broadcast %12 : f32 to vector<8x128xf32>
    %73 = arith.mulf %43, %72 : vector<8x128xf32>
    %74 = vector.broadcast %13 : f32 to vector<8x128xf32>
    %75 = arith.mulf %52, %74 : vector<8x128xf32>
    %76 = arith.addf %73, %75 : vector<8x128xf32>
    %77 = vector.broadcast %14 : f32 to vector<8x128xf32>
    %78 = arith.mulf %61, %77 : vector<8x128xf32>
    %79 = arith.addf %76, %78 : vector<8x128xf32>
    %80 = vector.broadcast %16 : f32 to vector<8x128xf32>
    %81 = arith.addf %79, %80 : vector<8x128xf32>
    %c0_28 = arith.constant 0 : index
    %c0_29 = arith.constant 0 : index
    %c0_30 = arith.constant 0 : index
    %82 = vector.load %arg6[%c0_28, %c0_29, %c0_30] : memref<2x8x128xf32, #tpu.memory_space<vmem>>, vector<1x8x128xf32>
    %83 = vector.shape_cast %82 : vector<1x8x128xf32> to vector<8x128xf32>
    %84 = vector.shape_cast %71 : vector<8x128xf32> to vector<1x8x128xf32>
    tpu.vector_store %arg6[%c0_28, %c0_29, %c0_30], %84 {strides = array<i32>} : memref<2x8x128xf32, #tpu.memory_space<vmem>>, vector<1x8x128xf32>,
    %c1_31 = arith.constant 1 : index
    %c0_32 = arith.constant 0 : index
    %c0_33 = arith.constant 0 : index
    %85 = vector.load %arg6[%c1_31, %c0_32, %c0_33] : memref<2x8x128xf32, #tpu.memory_space<vmem>>, vector<1x8x128xf32>
    %86 = vector.shape_cast %85 : vector<1x8x128xf32> to vector<8x128xf32>
    %87 = vector.shape_cast %81 : vector<8x128xf32> to vector<1x8x128xf32>
    tpu.vector_store %arg6[%c1_31, %c0_32, %c0_33], %87 {strides = array<i32>} : memref<2x8x128xf32, #tpu.memory_space<vmem>>, vector<1x8x128xf32>,
    %cst_34 = arith.constant 0xFF800000 : f32
    %88 = vector.broadcast %cst_34 : f32 to vector<8x128xf32>
    %89 = arith.select %30, %71, %88 : vector<8x128xi1>, vector<8x128xf32>
    %cst_35 = arith.constant 0xFF800000 : f32
    %90 = vector.broadcast %cst_35 : f32 to vector<8x128xf32>
    %91 = arith.select %30, %81, %90 : vector<8x128xi1>, vector<8x128xf32>
    %c0_36 = arith.constant 0 : index
    %c0_37 = arith.constant 0 : index
    %92 = vector.load %arg7[%c0_36, %c0_37] : memref<2x1xf32, #tpu.memory_space<vmem>>, vector<1x1xf32>
    %c0_38 = arith.constant 0 : index
    %c0_39 = arith.constant 0 : index
    %93 = vector.load %arg8[%c0_38, %c0_39] : memref<2x1xf32, #tpu.memory_space<vmem>>, vector<1x1xf32>
    %cst_40 = arith.constant dense<0xFF800000> : vector<8xf32>
    %94 = vector.multi_reduction <maximumf>, %89, %cst_40 [1] : vector<8x128xf32> to vector<8xf32>
    %95 = vector.shape_cast %94 : vector<8xf32> to vector<8x1xf32>
    %cst_41 = arith.constant dense<0xFF800000> : vector<1xf32>
    %96 = vector.multi_reduction <maximumf>, %95, %cst_41 [0] : vector<8x1xf32> to vector<1xf32>
    %97 = vector.shape_cast %96 : vector<1xf32> to vector<1x1xf32>
    %98 = arith.maximumf %92, %97 : vector<1x1xf32>
    %99 = vector.broadcast %98 : vector<1x1xf32> to vector<8x128xf32>
    %100 = arith.subf %89, %99 : vector<8x128xf32>
    %101 = math.exp %100 : vector<8x128xf32>
    %cst_42 = arith.constant dense<0.000000e+00> : vector<8xf32>
    %102 = vector.multi_reduction <add>, %101, %cst_42 [1] : vector<8x128xf32> to vector<8xf32>
    %103 = vector.shape_cast %102 : vector<8xf32> to vector<8x1xf32>
    %cst_43 = arith.constant dense<0.000000e+00> : vector<1xf32>
    %104 = vector.multi_reduction <add>, %103, %cst_43 [0] : vector<8x1xf32> to vector<1xf32>
    %105 = vector.shape_cast %104 : vector<1xf32> to vector<1x1xf32>
    %106 = arith.subf %92, %98 : vector<1x1xf32>
    %107 = math.exp %106 : vector<1x1xf32>
    %108 = arith.mulf %93, %107 : vector<1x1xf32>
    %109 = arith.addf %108, %105 : vector<1x1xf32>
    %c0_44 = arith.constant 0 : index
    %c0_45 = arith.constant 0 : index
    %110 = vector.load %arg8[%c0_44, %c0_45] : memref<2x1xf32, #tpu.memory_space<vmem>>, vector<1x1xf32>
    tpu.vector_store %arg8[%c0_44, %c0_45], %109 {strides = array<i32>} : memref<2x1xf32, #tpu.memory_space<vmem>>, vector<1x1xf32>,
    %c0_46 = arith.constant 0 : index
    %c0_47 = arith.constant 0 : index
    %111 = vector.load %arg7[%c0_46, %c0_47] : memref<2x1xf32, #tpu.memory_space<vmem>>, vector<1x1xf32>
    tpu.vector_store %arg7[%c0_46, %c0_47], %98 {strides = array<i32>} : memref<2x1xf32, #tpu.memory_space<vmem>>, vector<1x1xf32>,
    %c1_48 = arith.constant 1 : index
    %c0_49 = arith.constant 0 : index
    %112 = vector.load %arg7[%c1_48, %c0_49] : memref<2x1xf32, #tpu.memory_space<vmem>>, vector<1x1xf32>
    %c1_50 = arith.constant 1 : index
    %c0_51 = arith.constant 0 : index
    %113 = vector.load %arg8[%c1_50, %c0_51] : memref<2x1xf32, #tpu.memory_space<vmem>>, vector<1x1xf32>
    %cst_52 = arith.constant dense<0xFF800000> : vector<8xf32>
    %114 = vector.multi_reduction <maximumf>, %91, %cst_52 [1] : vector<8x128xf32> to vector<8xf32>
    %115 = vector.shape_cast %114 : vector<8xf32> to vector<8x1xf32>
    %cst_53 = arith.constant dense<0xFF800000> : vector<1xf32>
    %116 = vector.multi_reduction <maximumf>, %115, %cst_53 [0] : vector<8x1xf32> to vector<1xf32>
    %117 = vector.shape_cast %116 : vector<1xf32> to vector<1x1xf32>
    %118 = arith.maximumf %112, %117 : vector<1x1xf32>
    %119 = vector.broadcast %118 : vector<1x1xf32> to vector<8x128xf32>
    %120 = arith.subf %91, %119 : vector<8x128xf32>
    %121 = math.exp %120 : vector<8x128xf32>
    %cst_54 = arith.constant dense<0.000000e+00> : vector<8xf32>
    %122 = vector.multi_reduction <add>, %121, %cst_54 [1] : vector<8x128xf32> to vector<8xf32>
    %123 = vector.shape_cast %122 : vector<8xf32> to vector<8x1xf32>
    %cst_55 = arith.constant dense<0.000000e+00> : vector<1xf32>
    %124 = vector.multi_reduction <add>, %123, %cst_55 [0] : vector<8x1xf32> to vector<1xf32>
    %125 = vector.shape_cast %124 : vector<1xf32> to vector<1x1xf32>
    %126 = arith.subf %112, %118 : vector<1x1xf32>
    %127 = math.exp %126 : vector<1x1xf32>
    %128 = arith.mulf %113, %127 : vector<1x1xf32>
    %129 = arith.addf %128, %125 : vector<1x1xf32>
    %c1_56 = arith.constant 1 : index
    %c0_57 = arith.constant 0 : index
    %130 = vector.load %arg8[%c1_56, %c0_57] : memref<2x1xf32, #tpu.memory_space<vmem>>, vector<1x1xf32>
    tpu.vector_store %arg8[%c1_56, %c0_57], %129 {strides = array<i32>} : memref<2x1xf32, #tpu.memory_space<vmem>>, vector<1x1xf32>,
    %c1_58 = arith.constant 1 : index
    %c0_59 = arith.constant 0 : index
    %131 = vector.load %arg7[%c1_58, %c0_59] : memref<2x1xf32, #tpu.memory_space<vmem>>, vector<1x1xf32>
    tpu.vector_store %arg7[%c1_58, %c0_59], %118 {strides = array<i32>} : memref<2x1xf32, #tpu.memory_space<vmem>>, vector<1x1xf32>,
    %c0_60 = arith.constant 0 : index
    %c0_61 = arith.constant 0 : index
    %132 = vector.load %arg7[%c0_60, %c0_61] : memref<2x1xf32, #tpu.memory_space<vmem>>, vector<1x1xf32>
    %c0_62 = arith.constant 0 : index
    %c0_63 = arith.constant 0 : index
    %133 = vector.load %arg8[%c0_62, %c0_63] : memref<2x1xf32, #tpu.memory_space<vmem>>, vector<1x1xf32>
    %134 = math.log %133 : vector<1x1xf32>
    %135 = arith.addf %132, %134 : vector<1x1xf32>
    %c1_64 = arith.constant 1 : index
    %c0_65 = arith.constant 0 : index
    %136 = vector.load %arg7[%c1_64, %c0_65] : memref<2x1xf32, #tpu.memory_space<vmem>>, vector<1x1xf32>
    %c1_66 = arith.constant 1 : index
    %c0_67 = arith.constant 0 : index
    %137 = vector.load %arg8[%c1_66, %c0_67] : memref<2x1xf32, #tpu.memory_space<vmem>>, vector<1x1xf32>
    %138 = math.log %137 : vector<1x1xf32>
    %139 = arith.addf %136, %138 : vector<1x1xf32>
    %c0_i32_68 = arith.constant 0 : i32
    %c8_i32_69 = arith.constant 8 : i32
    %140 = arith.muli %c0_i32_68, %c8_i32_69 : i32
    %141 = tpu.assume_multiple %140, 8 : i32
    %c0_70 = arith.constant 0 : index
    %142 = arith.index_cast %141 : i32 to index
    %c0_71 = arith.constant 0 : index
    %143 = vector.load %arg6[%c0_70, %142, %c0_71] : memref<2x8x128xf32, #tpu.memory_space<vmem>>, vector<1x8x128xf32>
    %144 = vector.shape_cast %143 : vector<1x8x128xf32> to vector<8x128xf32>
    %145 = vector.broadcast %135 : vector<1x1xf32> to vector<8x128xf32>
    %146 = arith.subf %144, %145 : vector<8x128xf32>
    %c0_72 = arith.constant 0 : index
    %147 = arith.index_cast %141 : i32 to index
    %c0_73 = arith.constant 0 : index
    %148 = vector.load %arg6[%c0_72, %147, %c0_73] : memref<2x8x128xf32, #tpu.memory_space<vmem>>, vector<1x8x128xf32>
    %149 = vector.shape_cast %148 : vector<1x8x128xf32> to vector<8x128xf32>
    %150 = vector.shape_cast %146 : vector<8x128xf32> to vector<1x8x128xf32>
    tpu.vector_store %arg6[%c0_72, %147, %c0_73], %150 {strides = array<i32>} : memref<2x8x128xf32, #tpu.memory_space<vmem>>, vector<1x8x128xf32>,
    %c1_74 = arith.constant 1 : index
    %151 = arith.index_cast %141 : i32 to index
    %c0_75 = arith.constant 0 : index
    %152 = vector.load %arg6[%c1_74, %151, %c0_75] : memref<2x8x128xf32, #tpu.memory_space<vmem>>, vector<1x8x128xf32>
    %153 = vector.shape_cast %152 : vector<1x8x128xf32> to vector<8x128xf32>
    %154 = vector.broadcast %139 : vector<1x1xf32> to vector<8x128xf32>
    %155 = arith.subf %153, %154 : vector<8x128xf32>
    %c1_76 = arith.constant 1 : index
    %156 = arith.index_cast %141 : i32 to index
    %c0_77 = arith.constant 0 : index
    %157 = vector.load %arg6[%c1_76, %156, %c0_77] : memref<2x8x128xf32, #tpu.memory_space<vmem>>, vector<1x8x128xf32>
    %158 = vector.shape_cast %157 : vector<1x8x128xf32> to vector<8x128xf32>
    %159 = vector.shape_cast %155 : vector<8x128xf32> to vector<1x8x128xf32>
    tpu.vector_store %arg6[%c1_76, %156, %c0_77], %159 {strides = array<i32>} : memref<2x8x128xf32, #tpu.memory_space<vmem>>, vector<1x8x128xf32>,
    %c1_i32_78 = arith.constant 1 : i32
    return
  }
  func.func @transform_0(%arg0: i32) -> (i32, i32, i32) {
    %c0_i32 = arith.constant 0 : i32
    %c0_i32_0 = arith.constant 0 : i32
    %c0_i32_1 = arith.constant 0 : i32
    %c0_i32_2 = arith.constant 0 : i32
    return %c0_i32, %c0_i32_0, %c0_i32_1 : i32, i32, i32
  }
  func.func @transform_1(%arg0: i32) -> i32 {
    %c0_i32 = arith.constant 0 : i32
    %c0_i32_0 = arith.constant 0 : i32
    return %c0_i32 : i32
  }
  func.func @transform_2(%arg0: i32) -> i32 {
    %c0_i32 = arith.constant 0 : i32
    %c0_i32_0 = arith.constant 0 : i32
    return %c0_i32 : i32
  }
  func.func @transform_3(%arg0: i32) -> i32 {
    %c0_i32 = arith.constant 0 : i32
    %c0_i32_0 = arith.constant 0 : i32
    return %c0_i32 : i32
  }
  func.func @transform_4(%arg0: i32) -> i32 {
    %c0_i32 = arith.constant 0 : i32
    %c0_i32_0 = arith.constant 0 : i32
    return %c0_i32 : i32
  }
  func.func @transform_5(%arg0: i32) -> (i32, i32, i32) {
    %c0_i32 = arith.constant 0 : i32
    %c0_i32_0 = arith.constant 0 : i32
    %c0_i32_1 = arith.constant 0 : i32
    %c0_i32_2 = arith.constant 0 : i32
    return %c0_i32, %c0_i32_0, %c0_i32_1 : i32, i32, i32
  }
}

</mosaic_0001>

<llo_original>
// kernel: tpu_custom_call.1
$region0: #{tpu_custom_call.1}
  #allocation0 [shape = 'u32[]', space=smem, size = 0x4, offset = 0x4, fixed_abs, tag = 'smem constant byte address 0x4 - core index']
  #allocation1 [shape = 'u32[144,128]{1,0:T(1,128)}', space=vmem, size = 0x12000, scoped, tag = 'internal scratch']
  #allocation2 [shape = 'f32[2,1]{1,0:T(2,128)}', space=vmem, size = 0x400, scoped, tag = 'scratch operand']
  #allocation3 [shape = 'f32[2,1]{1,0:T(2,128)}', space=vmem, size = 0x400, scoped, tag = 'scratch operand']
  %s0 = inlined_call_operand.hbm [shape: f32[2,8,128], index: 0, kind: input, shape index: {}]
  %s1 = inlined_call_operand.vmem [shape: f32[6], index: 1, kind: input, shape index: {}]
  %s2 = inlined_call_operand.vmem [shape: f32[3], index: 2, kind: input, shape index: {}]
  %s3 = inlined_call_operand.vmem [shape: f32[6], index: 3, kind: input, shape index: {}]
  %s4 = inlined_call_operand.vmem [shape: f32[2], index: 4, kind: input, shape index: {}]
  %s5 = inlined_call_operand.hbm [shape: f32[2,8,128], index: 5, kind: output, shape index: {}]
  %s6 = sld [smem:[#allocation0]]
  $region50: #{tpu_custom_call.1} parent=0
    _
  %s8 = ssub.s32 1, %s6
  %s9 = scalar_select 0, %s8, %s6
  $region1: #{tpu_custom_call.1} parent=0
    #allocation4 [shape = 'u8[8192]{0}', space=vmem, size = 0x2000, scoped, tag = 'input window, operand 0, single buffered']
    #allocation5 [shape = 's32[1]{0}', space=sflag, size = 0x4, scoped, tag = 'scoped memory for tpu_custom_call.1']
    #allocation6 [shape = 's32[1]{0}', space=sflag, size = 0x4, scoped, tag = 'scoped memory for tpu_custom_call.1']
    #allocation7 [shape = 's32[1]{0}', space=sflag, size = 0x4, scoped, tag = 'scoped memory for tpu_custom_call.1']
    #allocation8 [shape = 'u8[512]{0}', space=smem, size = 0x200, scoped, tag = 'input window, operand 1, single buffered']
    #allocation9 [shape = 'u8[512]{0}', space=smem, size = 0x200, scoped, tag = 'input window, operand 2, single buffered']
    #allocation10 [shape = 's32[1]{0}', space=sflag, size = 0x4, scoped, tag = 'scoped memory for tpu_custom_call.1']
    #allocation11 [shape = 'u8[512]{0}', space=smem, size = 0x200, scoped, tag = 'input window, operand 3, single buffered']
    #allocation12 [shape = 'u8[512]{0}', space=smem, size = 0x200, scoped, tag = 'input window, operand 4, single buffered']
    #allocation13 [shape = 's32[1]{0}', space=sflag, size = 0x4, scoped, tag = 'scoped memory for tpu_custom_call.1']
    #allocation14 [shape = 'u8[8192]{0}', space=vmem, size = 0x2000, scoped, tag = 'output window, operand 0, single buffered']
    %10 = vsyncpa [#allocation5], 0
    %11 = vsyncpa [#allocation7], 0
    %12 = vsyncpa [#allocation10], 0
    %13 = vsyncpa [#allocation13], 0
    %14 = vsyncpa [#allocation6], 0
    // Predicated region
    $region2: #{tpu_custom_call.1} parent=1 // pred_check
      _
    $region3: #{tpu_custom_call.1} parent=1 // pred_check_branch
      %16 = sbr.rel (0) target = $region5
    $region4: #{tpu_custom_call.1} parent=1 // pred_region
      %s18 = ssub.s32 256, 256
      %19 = vsyncadd [#allocation5], %s18
      %s20 = sshll.u32 [#allocation4], 4
      %s21 = int_to_ptr.vmem [resolvable:$true] %s20
      %26 = dma.hbm_to_vmem [thread:$0]  %s0, 256, %s21, [#allocation5], 128, 128, 8
    $region5: #{tpu_custom_call.1} parent=1 // pred_fallthru
      _
    // Predicated region
    $region6: #{tpu_custom_call.1} parent=1 // pred_check
      _
    $region7: #{tpu_custom_call.1} parent=1 // pred_check_branch
      %28 = sbr.rel (0) target = $region9
    $region8: #{tpu_custom_call.1} parent=1 // pred_region
      %s30 = ssub.s32 16, 16
      %31 = vsyncadd [#allocation7], %s30
      %s33 = sshll.u32 %s1, 4
      %s34 = int_to_ptr.vmem [resolvable:$true] %s33
      %36 = dma.vmem_to_smem %s34, 16, [#allocation8], [#allocation7]
    $region9: #{tpu_custom_call.1} parent=1 // pred_fallthru
      _
    // Predicated region
    $region10: #{tpu_custom_call.1} parent=1 // pred_check
      _
    $region11: #{tpu_custom_call.1} parent=1 // pred_check_branch
      %38 = sbr.rel (0) target = $region13
    $region12: #{tpu_custom_call.1} parent=1 // pred_region
      %s40 = ssub.s32 16, 16
      %41 = vsyncadd [#allocation10], %s40
      %s43 = sshll.u32 %s2, 4
      %s44 = int_to_ptr.vmem [resolvable:$true] %s43
      %46 = dma.vmem_to_smem %s44, 16, [#allocation9], [#allocation10]
    $region13: #{tpu_custom_call.1} parent=1 // pred_fallthru
      _
    // Predicated region
    $region14: #{tpu_custom_call.1} parent=1 // pred_check
      _
    $region15: #{tpu_custom_call.1} parent=1 // pred_check_branch
      %48 = sbr.rel (0) target = $region17
    $region16: #{tpu_custom_call.1} parent=1 // pred_region
      %s50 = ssub.s32 16, 16
      %51 = vsyncadd [#allocation10], %s50
      %s53 = sshll.u32 %s3, 4
      %s54 = int_to_ptr.vmem [resolvable:$true] %s53
      %56 = dma.vmem_to_smem %s54, 16, [#allocation11], [#allocation10]
    $region17: #{tpu_custom_call.1} parent=1 // pred_fallthru
      _
    // Predicated region
    $region18: #{tpu_custom_call.1} parent=1 // pred_check
      _
    $region19: #{tpu_custom_call.1} parent=1 // pred_check_branch
      %58 = sbr.rel (0) target = $region21
    $region20: #{tpu_custom_call.1} parent=1 // pred_region
      %s60 = ssub.s32 16, 16
      %61 = vsyncadd [#allocation13], %s60
      %s63 = sshll.u32 %s4, 4
      %s64 = int_to_ptr.vmem [resolvable:$true] %s63
      %66 = dma.vmem_to_smem %s64, 16, [#allocation12], [#allocation13]
    $region21: #{tpu_custom_call.1} parent=1 // pred_fallthru
      _
    // Predicated region
    $region22: #{tpu_custom_call.1} parent=1 // pred_check
      _
    $region23: #{tpu_custom_call.1} parent=1 // pred_check_branch
      %68 = sbr.rel (0) target = $region25
    $region24: #{tpu_custom_call.1} parent=1 // pred_region
      %69 = dma.done [#allocation5], 256
    $region25: #{tpu_custom_call.1} parent=1 // pred_fallthru
      _
    // Predicated region
    $region26: #{tpu_custom_call.1} parent=1 // pred_check
      _
    $region27: #{tpu_custom_call.1} parent=1 // pred_check_branch
      %71 = sbr.rel (0) target = $region29
    $region28: #{tpu_custom_call.1} parent=1 // pred_region
      %72 = dma.done [#allocation7], 16
    $region29: #{tpu_custom_call.1} parent=1 // pred_fallthru
      _
    // Predicated region
    $region30: #{tpu_custom_call.1} parent=1 // pred_check
      _
    $region31: #{tpu_custom_call.1} parent=1 // pred_check_branch
      %74 = sbr.rel (0) target = $region33
    $region32: #{tpu_custom_call.1} parent=1 // pred_region
      %75 = dma.done [#allocation10], 16
    $region33: #{tpu_custom_call.1} parent=1 // pred_fallthru
      _
    // Predicated region
    $region34: #{tpu_custom_call.1} parent=1 // pred_check
      _
    $region35: #{tpu_custom_call.1} parent=1 // pred_check_branch
      %77 = sbr.rel (0) target = $region37
    $region36: #{tpu_custom_call.1} parent=1 // pred_region
      %78 = dma.done [#allocation10], 16
    $region37: #{tpu_custom_call.1} parent=1 // pred_fallthru
      _
    // Predicated region
    $region38: #{tpu_custom_call.1} parent=1 // pred_check
      _
    $region39: #{tpu_custom_call.1} parent=1 // pred_check_branch
      %80 = sbr.rel (0) target = $region41
    $region40: #{tpu_custom_call.1} parent=1 // pred_region
      %81 = dma.done [#allocation13], 16
    $region41: #{tpu_custom_call.1} parent=1 // pred_fallthru
      _
    %82 = sfence
    %s83 = sld [smem:[#allocation8]]
    %s84 = sld [smem:[#allocation8 + $0x1]]
    %s85 = sld [smem:[#allocation8 + $0x2]]
    %s86 = sld [smem:[#allocation8 + $0x3]]
    %s87 = sld [smem:[#allocation8 + $0x4]]
    %s88 = sld [smem:[#allocation8 + $0x5]]
    %s89 = sld [smem:[#allocation9]]
    %s90 = sld [smem:[#allocation9 + $0x1]]
    %s91 = sld [smem:[#allocation9 + $0x2]]
    %s92 = sld [smem:[#allocation11]]
    %s93 = sld [smem:[#allocation11 + $0x1]]
    %s94 = sld [smem:[#allocation11 + $0x2]]
    %s95 = sld [smem:[#allocation11 + $0x3]]
    %s96 = sld [smem:[#allocation11 + $0x4]]
    %s97 = sld [smem:[#allocation11 + $0x5]]
    %s98 = sld [smem:[#allocation12]]
    %s99 = sld [smem:[#allocation12 + $0x1]]
    %vm100 = vcmask 1024
    %101 = vst.msk [vmem:[#allocation2] sm:$0x3] %vm100, -inf
    %102 = vst.msk [vmem:[#allocation3] sm:$0x3] %vm100, 0.0
    %v103 = vlaneseq
    %v104 = vshrl.u32 %v103, 7
    %v105 = vlaneseq
    %v106 = vand.u32 %v105, 127
    %v107 = vmul.u32 %v104, 128
    %v108 = vadd.s32 %v107, %v106
    %vm109 = vcmp.lt.s32.totalorder %v108, 8
    %v110 = vld [vmem:[#allocation4] sm:$0xff]
    %s111 = scalar_lea.vmem [#allocation4], 8
    %v112 = vld [vmem:[%s111] sm:$0xff]
    %v113 = vstv %s83
    %v114 = vmul.f32 %v110, %v113
    %v115 = vstv %s84
    %v116 = vmul.f32 %v112, %v115
    %v117 = vadd.f32 %v114, %v116
    %v118 = vstv %s89
    %v119 = vadd.f32 %v117, %v118
    %v120 = vmax.f32 %v119, 0.0
    %v121 = vstv %s85
    %v122 = vmul.f32 %v110, %v121
    %v123 = vstv %s86
    %v124 = vmul.f32 %v112, %v123
    %v125 = vadd.f32 %v122, %v124
    %v126 = vstv %s90
    %v127 = vadd.f32 %v125, %v126
    %v128 = vmax.f32 %v127, 0.0
    %v129 = vstv %s87
    %v130 = vmul.f32 %v110, %v129
    %v131 = vstv %s88
    %v132 = vmul.f32 %v112, %v131
    %v133 = vadd.f32 %v130, %v132
    %v134 = vstv %s91
    %v135 = vadd.f32 %v133, %v134
    %v136 = vmax.f32 %v135, 0.0
    %v137 = vstv %s92
    %v138 = vmul.f32 %v120, %v137
    %v139 = vstv %s93
    %v140 = vmul.f32 %v128, %v139
    %v141 = vadd.f32 %v138, %v140
    %v142 = vstv %s94
    %v143 = vmul.f32 %v136, %v142
    %v144 = vadd.f32 %v141, %v143
    %v145 = vstv %s98
    %v146 = vadd.f32 %v144, %v145
    %v147 = vstv %s95
    %v148 = vmul.f32 %v120, %v147
    %v149 = vstv %s96
    %v150 = vmul.f32 %v128, %v149
    %v151 = vadd.f32 %v148, %v150
    %v152 = vstv %s97
    %v153 = vmul.f32 %v136, %v152
    %v154 = vadd.f32 %v151, %v153
    %v155 = vstv %s99
    %v156 = vadd.f32 %v154, %v155
    %157 = vst [vmem:[#allocation14] sm:$0xff] %v146
    %s158 = scalar_lea.vmem [#allocation14], 8
    %159 = vst [vmem:[%s158] sm:$0xff] %v156
    %v160 = vsel %vm109, %v146, -inf
    %v161 = vsel %vm109, %v156, -inf
    %v162 = vld [vmem:[#allocation2] sm:$0x1]
    %v163 = vld [vmem:[#allocation3] sm:$0x1]
    %164 = vmax.xlane.f32.xlu0 %v160
    %v165 = vpop.xlane.xlu0 %164
    %v166 = vrot.slane %v165, 4
    %v167 = vmax.f32 %v165, %v166
    %v168 = vrot.slane %v167, 2
    %v169 = vmax.f32 %v167, %v168
    %v170 = vrot.slane %v169, 1
    %v171 = vmax.f32 %v169, %v170
    %v172 = vmax.f32 %v162, %v171
    %s174 = vtos %v172
    %v175 = vstv %s174
    %v177 = vsub.f32 %v160, %v175
    %v178 = vmul.f32 %v177, 1.442695
    %v179 = vpow.pop %v178
    %180 = vadd.xlane.f32.xlu0 %v179
    %v181 = vpop.xlane.xlu0 %180
    %v182 = vrot.slane %v181, 4
    %v183 = vadd.f32 %v181, %v182
    %v184 = vrot.slane %v183, 2
    %v185 = vadd.f32 %v183, %v184
    %v186 = vrot.slane %v185, 1
    %v187 = vadd.f32 %v185, %v186
    %v188 = vsub.f32 %v162, %v172
    %v189 = vmul.f32 %v188, 1.442695
    %v190 = vpow.pop %v189
    %v191 = vmul.f32 %v163, %v190
    %v192 = vadd.f32 %v191, %v187
    %vm193 = vcmask 0
    %194 = vst.msk [vmem:[#allocation3] sm:$0x1] %vm193, %v192
    %195 = vst.msk [vmem:[#allocation2] sm:$0x1] %vm193, %v172
    %v196 = vld [vmem:[#allocation2 + $0x1] sm:$0x1]
    %v197 = vld [vmem:[#allocation3 + $0x1] sm:$0x1]
    %198 = vmax.xlane.f32.xlu0 %v161
    %v199 = vpop.xlane.xlu0 %198
    %v200 = vrot.slane %v199, 4
    %v201 = vmax.f32 %v199, %v200
    %v202 = vrot.slane %v201, 2
    %v203 = vmax.f32 %v201, %v202
    %v204 = vrot.slane %v203, 1
    %v205 = vmax.f32 %v203, %v204
    %v206 = vmax.f32 %v196, %v205
    %s208 = vtos %v206
    %v209 = vstv %s208
    %v211 = vsub.f32 %v161, %v209
    %v212 = vmul.f32 %v211, 1.442695
    %v213 = vpow.pop %v212
    %214 = vadd.xlane.f32.xlu0 %v213
    %v215 = vpop.xlane.xlu0 %214
    %v216 = vrot.slane %v215, 4
    %v217 = vadd.f32 %v215, %v216
    %v218 = vrot.slane %v217, 2
    %v219 = vadd.f32 %v217, %v218
    %v220 = vrot.slane %v219, 1
    %v221 = vadd.f32 %v219, %v220
    %v222 = vsub.f32 %v196, %v206
    %v223 = vmul.f32 %v222, 1.442695
    %v224 = vpow.pop %v223
    %v225 = vmul.f32 %v197, %v224
    %v226 = vadd.f32 %v225, %v221
    %227 = vst.msk [vmem:[#allocation3 + $0x1] sm:$0x1] %vm193, %v226
    %228 = vst.msk [vmem:[#allocation2 + $0x1] sm:$0x1] %vm193, %v206
    %v229 = vld [vmem:[#allocation2] sm:$0x1]
    %v230 = vld [vmem:[#allocation3] sm:$0x1]
    %v231 = vlog2.pop %v230
    %v232 = vmul.f32 %v231, 0.6931472
    %v233 = vadd.f32 %v229, %v232
    %v234 = vld [vmem:[#allocation2 + $0x1] sm:$0x1]
    %v235 = vld [vmem:[#allocation3 + $0x1] sm:$0x1]
    %v236 = vlog2.pop %v235
    %v237 = vmul.f32 %v236, 0.6931472
    %v238 = vadd.f32 %v234, %v237
    %v239 = vld [vmem:[#allocation14] sm:$0xff]
    %s241 = vtos %v233
    %v242 = vstv %s241
    %v244 = vsub.f32 %v239, %v242
    %245 = vst [vmem:[#allocation14] sm:$0xff] %v244
    %s246 = sadd.s32 0, 8
    %s247 = scalar_lea.vmem [#allocation14], %s246
    %v248 = vld [vmem:[%s247] sm:$0xff]
    %s250 = vtos %v238
    %v251 = vstv %s250
    %v253 = vsub.f32 %v248, %v251
    %254 = vst [vmem:[%s247] sm:$0xff] %v253
    // Predicated region
    $region42: #{tpu_custom_call.1} parent=1 // pred_check
      _
    $region43: #{tpu_custom_call.1} parent=1 // pred_check_branch
      %256 = sbr.rel (0) target = $region45
    $region44: #{tpu_custom_call.1} parent=1 // pred_region
      %s258 = ssub.s32 256, 256
      %259 = vsyncadd [#allocation6], %s258
      %s260 = sshll.u32 [#allocation14], 4
      %s261 = int_to_ptr.vmem [resolvable:$true] %s260
      %266 = dma.vmem_to_hbm [thread:$0]  %s261, 256, %s5, [#allocation6], 128, 128, 8
    $region45: #{tpu_custom_call.1} parent=1 // pred_fallthru
      _
    // Predicated region
    $region46: #{tpu_custom_call.1} parent=1 // pred_check
      _
    $region47: #{tpu_custom_call.1} parent=1 // pred_check_branch
      %268 = sbr.rel (0) target = $region49
    $region48: #{tpu_custom_call.1} parent=1 // pred_region
      %269 = dma.done [#allocation6], 256
    $region49: #{tpu_custom_call.1} parent=1 // pred_fallthru
      _
    %270 = vsyncpa [#allocation5], 1
    %271 = vsyncpa [#allocation6], 1
    %272 = vsyncpa [#allocation7], 1
    %273 = vsyncpa [#allocation10], 1
    %274 = vsyncpa [#allocation13], 1

</llo_original>
